<compile_context>
chip_gen: v6e
topology: v6e:2x2x1
jax: 0.10.0
libtpu: 0.0.40
codegen_flags: <defaults>
</compile_context>

<pallas_src>
import jax
import jax.numpy as jnp
from jax.experimental import pallas as pl
from jax.experimental.pallas import tpu as pltpu


def _conv_bn_relu_kernel(w_ref, b_ref, x_ref, o_ref):
    # w_ref: (C_out, C_in)  folded conv weight (BN scale applied), VMEM-resident
    # b_ref: (C_out, 1)     folded bias/shift, VMEM-resident
    # x_ref: (C_in, THW)    one HW tile of one batch element
    # o_ref: (C_out, THW)
    z = jnp.dot(w_ref[...], x_ref[...], preferred_element_type=jnp.float32)
    z = z + b_ref[...]                      # broadcast (C_out,1) over lanes
    o_ref[...] = jnp.maximum(z, 0.0).astype(o_ref.dtype)


def _pick_hw_tile(c_in, c_out, hw, bytes_per_elem, *, max_tile=2048,
                  vmem_budget_bytes=24 << 20):
    """Largest lane-dense (multiple-of-128) HW tile that fits a conservative
    VMEM budget (valid on v5e/v6e/v7x default scoped limits)."""
    hw_pad128 = pl.cdiv(hw, 128) * 128
    resident = 2 * c_out * (c_in + 1) * 4            # folded params (f32)
    per_col = 2 * (c_in + c_out) * bytes_per_elem    # double-buffered x & out
    fit = max(128, (vmem_budget_bytes - resident) // max(per_col, 1))
    tile = min(max_tile, fit, hw_pad128)
    return max(128, (tile // 128) * 128)


def basic_conv1d_forward(x, conv_w, conv_b, bn_gamma, bn_beta, bn_mean, bn_var,
                         *, eps=1e-3, compute_dtype=jnp.float32,
                         max_hw_tile=2048):
    """x: (N, C_in, H, W). conv_w: (C_out, C_in, 1, 1). Returns (N, C_out, H, W)."""
    N, C_in, H, W = x.shape
    C_out = conv_w.shape[0]
    HW = H * W
    out_dtype = x.dtype

    # ---- Fold BatchNorm (eval mode) into conv weight / bias (plain JAX glue) ----
    #   y = gamma * (conv(x) + b - mean) / sqrt(var + eps) + beta
    scale = bn_gamma.astype(jnp.float32) / jnp.sqrt(bn_var.astype(jnp.float32) + eps)
    w2d = (conv_w.reshape(C_out, C_in).astype(jnp.float32) * scale[:, None])
    bias = (scale * (conv_b.astype(jnp.float32) - bn_mean.astype(jnp.float32))
            + bn_beta.astype(jnp.float32))[:, None]                  # (C_out, 1)

    # Carry activations / weights in compute_dtype (e.g. bf16) to cut HBM traffic;
    # accumulation stays in f32 inside the kernel.
    w2d = w2d.astype(compute_dtype)
    x2d = x.reshape(N, C_in, HW).astype(compute_dtype)

    # ---- Tile the spatial axis (lane-dense, VMEM-bounded) ----
    bytes_per_elem = jnp.dtype(compute_dtype).itemsize
    THW = _pick_hw_tile(C_in, C_out, HW, bytes_per_elem, max_tile=max_hw_tile)
    HW_pad = pl.cdiv(HW, THW) * THW
    if HW_pad != HW:
        # Zero-pad spatial columns; 1x1 conv is pointwise over HW, padded columns
        # are sliced off below. Keeps every store unmasked / lane-dense.
        x2d = jnp.pad(x2d, ((0, 0), (0, 0), (0, HW_pad - HW)))
    num_hw_tiles = HW_pad // THW

    cost = pl.CostEstimate(
        flops=2 * N * C_out * C_in * HW_pad,
        transcendentals=0,
        bytes_accessed=(x2d.size * bytes_per_elem
                        + w2d.size * bytes_per_elem
                        + bias.size * 4
                        + N * C_out * HW_pad * jnp.dtype(out_dtype).itemsize),
    )

    out = pl.pallas_call(
        _conv_bn_relu_kernel,
        out_shape=jax.ShapeDtypeStruct((N, C_out, HW_pad), out_dtype),
        grid_spec=pltpu.PrefetchScalarGridSpec(
            num_scalar_prefetch=0,
            grid=(N, num_hw_tiles),
            in_specs=[
                # Constant index_map -> weight/bias stay resident in VMEM.
                pl.BlockSpec((C_out, C_in), lambda n, h: (0, 0)),
                pl.BlockSpec((C_out, 1), lambda n, h: (0, 0)),
                pl.BlockSpec((None, C_in, THW), lambda n, h: (n, 0, h)),
            ],
            out_specs=pl.BlockSpec((None, C_out, THW), lambda n, h: (n, 0, h)),
        ),
        compiler_params=pltpu.CompilerParams(
            dimension_semantics=("parallel", "parallel"),
            vmem_limit_bytes=32 << 20,
        ),
        cost_estimate=cost,
    )(w2d, bias, x2d)

    if HW_pad != HW:
        out = out[:, :, :HW]
    return out.reshape(N, C_out, H, W)


def _reference(x, conv_w, conv_b, bn_gamma, bn_beta, bn_mean, bn_var, eps=1e-3):
    # Pure-JAX reference of the same (eval-mode) forward.
    N, C_in, H, W = x.shape
    C_out = conv_w.shape[0]
    z = (jnp.einsum("oc,nchw->nohw", conv_w.reshape(C_out, C_in), x)
         + conv_b[None, :, None, None])
    z = (z - bn_mean[None, :, None, None]) / jnp.sqrt(bn_var + eps)[None, :, None, None]
    z = z * bn_gamma[None, :, None, None] + bn_beta[None, :, None, None]
    return jnp.maximum(z, 0.0)


if __name__ == "__main__":
    key = jax.random.PRNGKey(0)
    k_x, k_w, k_b, k_g, k_be, k_m, k_v = jax.random.split(key, 7)

    N, C_in, C_out, H, W = 2, 4, 8, 16, 16

    x = jax.random.normal(k_x, (N, C_in, H, W), dtype=jnp.float32)
    conv_w = jax.random.normal(k_w, (C_out, C_in, 1, 1), dtype=jnp.float32) * 0.1
    conv_b = jax.random.normal(k_b, (C_out,), dtype=jnp.float32) * 0.1
    bn_gamma = 1.0 + 0.1 * jax.random.normal(k_g, (C_out,), dtype=jnp.float32)
    bn_beta = 0.1 * jax.random.normal(k_be, (C_out,), dtype=jnp.float32)
    bn_mean = 0.1 * jax.random.normal(k_m, (C_out,), dtype=jnp.float32)
    bn_var = jax.nn.softplus(jax.random.normal(k_v, (C_out,), dtype=jnp.float32))

    # Force a small HW tile (128) so the multi-tile grid path is exercised at
    # these small test shapes (HW=256 -> grid=(2, 2)).
    out = basic_conv1d_forward(x, conv_w, conv_b, bn_gamma, bn_beta, bn_mean,
                               bn_var, max_hw_tile=128)
    out = jax.block_until_ready(out)

    ref = _reference(x, conv_w, conv_b, bn_gamma, bn_beta, bn_mean, bn_var)
    assert out.shape == (N, C_out, H, W)
    assert jnp.allclose(out, ref, atol=1e-4, rtol=1e-4), "mismatch vs reference"

    # Sanity-check the bf16-carry path as well (looser tolerance).
    out_bf16 = jax.block_until_ready(
        basic_conv1d_forward(x, conv_w, conv_b, bn_gamma, bn_beta, bn_mean,
                             bn_var, compute_dtype=jnp.bfloat16,
                             max_hw_tile=128))
    assert jnp.allclose(out_bf16, ref, atol=5e-2, rtol=5e-2), "bf16 mismatch"

    print("KERNEL_OK")
</pallas_src>

<mosaic_0001>
module attributes {stable_mosaic.version = 11 : i64} {
  func.func @_conv_bn_relu_kernel(%arg0: i32, %arg1: i32, %arg2: memref<8x4xf32, #tpu.memory_space<vmem>>, %arg3: memref<8x1xf32, #tpu.memory_space<vmem>>, %arg4: memref<1x4x128xf32, #tpu.memory_space<vmem>>, %arg5: memref<1x8x128xf32, #tpu.memory_space<vmem>>) attributes {dimension_semantics = [#tpu.dimension_semantics<parallel>, #tpu.dimension_semantics<parallel>], iteration_bounds = array<i64: 2, 2>, scalar_prefetch = 0 : i64, scratch_operands = 0 : i64, tpu.core_type = #tpu.core_type<tc>, window_params = [{pipeline_mode = #tpu.pipeline_mode<synchronous>, transform_indices = @transform_0, window_bounds = array<i64: 8, 4>}, {pipeline_mode = #tpu.pipeline_mode<synchronous>, transform_indices = @transform_1, window_bounds = array<i64: 8, 1>}, {transform_indices = @transform_2, window_bounds = array<i64: 1, 4, 128>}, {transform_indices = @transform_3, window_bounds = array<i64: 1, 8, 128>}]} {
    %c0 = arith.constant 0 : index
    %c0_0 = arith.constant 0 : index
    %0 = vector.load %arg2[%c0, %c0_0] : memref<8x4xf32, #tpu.memory_space<vmem>>, vector<8x4xf32>
    %c0_1 = arith.constant 0 : index
    %c0_2 = arith.constant 0 : index
    %c0_3 = arith.constant 0 : index
    %1 = vector.load %arg4[%c0_1, %c0_2, %c0_3] : memref<1x4x128xf32, #tpu.memory_space<vmem>>, vector<1x4x128xf32>
    %2 = vector.shape_cast %1 : vector<1x4x128xf32> to vector<4x128xf32>
    %cst = arith.constant dense<0.000000e+00> : vector<8x128xf32>
    %3 = tpu.matmul %0, %2, %cst {dimension_numbers = #tpu.dot_dimension_numbers<[1], [0], [0], [1], [0, 0, 1, 1], [], []>} : vector<8x4xf32>, vector<4x128xf32>, vector<8x128xf32> -> vector<8x128xf32>
    %c0_4 = arith.constant 0 : index
    %c0_5 = arith.constant 0 : index
    %4 = vector.load %arg3[%c0_4, %c0_5] : memref<8x1xf32, #tpu.memory_space<vmem>>, vector<8x1xf32>
    %5 = vector.broadcast %4 : vector<8x1xf32> to vector<8x128xf32>
    %6 = arith.addf %3, %5 : vector<8x128xf32>
    %cst_6 = arith.constant 0.000000e+00 : f32
    %7 = vector.broadcast %cst_6 : f32 to vector<8x128xf32>
    %8 = arith.maximumf %6, %7 : vector<8x128xf32>
    %c0_7 = arith.constant 0 : index
    %c0_8 = arith.constant 0 : index
    %c0_9 = arith.constant 0 : index
    %9 = vector.load %arg5[%c0_7, %c0_8, %c0_9] : memref<1x8x128xf32, #tpu.memory_space<vmem>>, vector<1x8x128xf32>
    %10 = vector.shape_cast %9 : vector<1x8x128xf32> to vector<8x128xf32>
    %11 = vector.shape_cast %8 : vector<8x128xf32> to vector<1x8x128xf32>
    tpu.vector_store %arg5[%c0_7, %c0_8, %c0_9], %11 {strides = array<i32>} : memref<1x8x128xf32, #tpu.memory_space<vmem>>, vector<1x8x128xf32>,
    return
  }
  func.func @transform_0(%arg0: i32, %arg1: i32) -> (i32, i32) {
    %c0_i32 = arith.constant 0 : i32
    %c0_i32_0 = arith.constant 0 : i32
    %c0_i32_1 = arith.constant 0 : i32
    return %c0_i32, %c0_i32_0 : i32, i32
  }
  func.func @transform_1(%arg0: i32, %arg1: i32) -> (i32, i32) {
    %c0_i32 = arith.constant 0 : i32
    %c0_i32_0 = arith.constant 0 : i32
    %c0_i32_1 = arith.constant 0 : i32
    return %c0_i32, %c0_i32_0 : i32, i32
  }
  func.func @transform_2(%arg0: i32, %arg1: i32) -> (i32, i32, i32) {
    %c0_i32 = arith.constant 0 : i32
    %c0_i32_0 = arith.constant 0 : i32
    return %arg0, %c0_i32, %arg1 : i32, i32, i32
  }
  func.func @transform_3(%arg0: i32, %arg1: i32) -> (i32, i32, i32) {
    %c0_i32 = arith.constant 0 : i32
    %c0_i32_0 = arith.constant 0 : i32
    return %arg0, %c0_i32, %arg1 : i32, i32, i32
  }
}

</mosaic_0001>

<llo_original>
// kernel: tpu_custom_call.1
$region0: #{tpu_custom_call.1}
  #allocation0 [shape = 'u32[]', space=smem, size = 0x4, offset = 0x4, fixed_abs, tag = 'smem constant byte address 0x4 - core index']
  #allocation1 [shape = 'u32[144,128]{1,0:T(1,128)}', space=vmem, size = 0x12000, scoped, tag = 'internal scratch']
  %s0 = inlined_call_operand.vmem [shape: f32[8,4], index: 0, kind: input, shape index: {}]
  %s1 = inlined_call_operand.vmem [shape: f32[8,1], index: 1, kind: input, shape index: {}]
  %s2 = inlined_call_operand.vmem [shape: f32[2,4,256], index: 2, kind: input, shape index: {}]
  %s3 = inlined_call_operand.hbm [shape: f32[2,8,256], index: 3, kind: output, shape index: {}]
  %s4 = sld [smem:[#allocation0]]
  $region45: #{tpu_custom_call.1} parent=0
    _
  %s6 = ssub.s32 1, %s4
  %s7 = scalar_select 0, %s6, %s4
  $region1: #{tpu_custom_call.1} parent=0
    #allocation2 [shape = 'u8[8192]{0}', space=vmem, size = 0x2000, scoped, tag = 'output window, operand 0']
    #allocation3 [shape = 's32[2]{0}', space=sflag, size = 0x8, scoped, tag = 'scoped memory for tpu_custom_call.1']
    %8 = vsyncpa [#allocation3], 0
    %s9 = scalar_lea.sflag [#allocation3], 1
    %10 = vsyncpa %s9, 0
    loop: start=0, step=1, limit=6
    $region2: #{tpu_custom_call.1} parent=1 // loop_pre_header
      _
    $region3: #{tpu_custom_call.1} parent=1 // loop_header
      %s12 = sphi 0, %s16
      %p13 = scmp.ge.s32.totalorder %s12, 6
      %s19 = sphi 0, %s31
      %s20 = sphi 0, %s27
      %s21 = sphi 0, %s19
      %s22 = sphi 0, %s20
      %s23 = sphi 0, %s21
      %s24 = sphi 0, %s22
      %s32 = sphi 0, %s32
      %s34 = sphi 0, %s32
      %s35 = sphi 0, %s34
      %s49 = sphi 0, %s35
      %s53 = sphi 0, %s53
      %s55 = sphi 0, %s53
      %s56 = sphi 0, %s55
      %s70 = sphi 0, %s56
      %s78 = sphi 0, %s80
      %s81 = sphi 0, %s78
      %s82 = sphi 0, %s81
      %s98 = sphi 0, %s82
      %s106 = sphi 0, %s108
      %s109 = sphi 0, %s106
      %s110 = sphi 0, %s109
      %s126 = sphi 0, %s110
    $region4: #{tpu_custom_call.1} parent=1 // loop_header_branch
      %15 = sbr.rel (%p13) target = $region8
    $region5: #{tpu_custom_call.1} parent=1 // loop_body
      %s17 = ssub.s32 %s12, 1
      %s18 = ssub.s32 %s12, 2
      %s25 = sadd.s32 1, %s20
      %p26 = scmp.ge.s32.totalorder %s25, 2
      %s27 = scalar_select %p26, 0, %s25
      %s28 = sadd.s32 1, %s19
      %s29 = scalar_select %p26, %s28, %s19
      %p30 = scmp.ge.s32.totalorder %s29, 2
      %s31 = scalar_select %p30, 0, %s29
      %s33 = sadd.s32 %s32, 1
      %p36 = scmp.eq.s32.totalorder %s12, 3
      %p37 = scmp.ne.s32.totalorder %s32, %s34
      %p38 = scmp.eq.s32.totalorder %s12, 0
      %p39 = por %p37, %p38
      %p40 = scmp.ne.s32.totalorder %s32, %s34
      %p41 = scmp.eq.s32.totalorder %s17, 3
      %p42 = por %p40, %p41
      %p43 = scmp.ne.s32.totalorder %s34, %s35
      %p44 = scmp.eq.s32.totalorder %s17, 0
      %p45 = por %p43, %p44
      %p46 = scmp.ne.s32.totalorder %s34, %s35
      %p47 = scmp.eq.s32.totalorder %s18, 3
      %p48 = por %p46, %p47
      %p50 = scmp.ne.s32.totalorder %s35, %s49
      %p51 = scmp.eq.s32.totalorder %s18, 0
      %p52 = por %p50, %p51
      %s54 = sadd.s32 %s53, 1
      %p57 = scmp.eq.s32.totalorder %s12, 3
      %p58 = scmp.ne.s32.totalorder %s53, %s55
      %p59 = scmp.eq.s32.totalorder %s12, 0
      %p60 = por %p58, %p59
      %p61 = scmp.ne.s32.totalorder %s53, %s55
      %p62 = scmp.eq.s32.totalorder %s17, 3
      %p63 = por %p61, %p62
      %p64 = scmp.ne.s32.totalorder %s55, %s56
      %p65 = scmp.eq.s32.totalorder %s17, 0
      %p66 = por %p64, %p65
      %p67 = scmp.ne.s32.totalorder %s55, %s56
      %p68 = scmp.eq.s32.totalorder %s18, 3
      %p69 = por %p67, %p68
      %p71 = scmp.ne.s32.totalorder %s56, %s70
      %p72 = scmp.eq.s32.totalorder %s18, 0
      %p73 = por %p71, %p72
      %s74 = ssub.s32 %s19, %s31
      %s75 = ssub.s32 %s20, %s27
      %s76 = sor.u32 %s74, %s75
      %p77 = scmp.eq.s32.totalorder %s76, 0
      %s79 = sadd.s32 %s78, 1
      %s80 = scalar_select %p77, %s78, %s79
      %p83 = pneg %p77
      %p84 = scmp.eq.s32.totalorder %s12, 3
      %p85 = por %p83, %p84
      %p86 = scmp.ne.s32.totalorder %s78, %s81
      %p87 = scmp.eq.s32.totalorder %s12, 0
      %p88 = por %p86, %p87
      %p89 = scmp.ne.s32.totalorder %s78, %s81
      %p90 = scmp.eq.s32.totalorder %s17, 3
      %p91 = por %p89, %p90
      %p92 = scmp.ne.s32.totalorder %s81, %s82
      %p93 = scmp.eq.s32.totalorder %s17, 0
      %p94 = por %p92, %p93
      %p95 = scmp.ne.s32.totalorder %s81, %s82
      %p96 = scmp.eq.s32.totalorder %s18, 3
      %p97 = por %p95, %p96
      %p99 = scmp.ne.s32.totalorder %s82, %s98
      %p100 = scmp.eq.s32.totalorder %s18, 0
      %p101 = por %p99, %p100
      %s102 = ssub.s32 %s19, %s31
      %s103 = ssub.s32 %s20, %s27
      %s104 = sor.u32 %s102, %s103
      %p105 = scmp.eq.s32.totalorder %s104, 0
      %s107 = sadd.s32 %s106, 1
      %s108 = scalar_select %p105, %s106, %s107
      %p111 = pneg %p105
      %p112 = scmp.eq.s32.totalorder %s12, 3
      %p113 = por %p111, %p112
      %p114 = scmp.ne.s32.totalorder %s106, %s109
      %p115 = scmp.eq.s32.totalorder %s12, 0
      %p116 = por %p114, %p115
      %p117 = scmp.ne.s32.totalorder %s106, %s109
      %p118 = scmp.eq.s32.totalorder %s17, 3
      %p119 = por %p117, %p118
      %p120 = scmp.ne.s32.totalorder %s109, %s110
      %p121 = scmp.eq.s32.totalorder %s17, 0
      %p122 = por %p120, %p121
      %p123 = scmp.ne.s32.totalorder %s109, %s110
      %p124 = scmp.eq.s32.totalorder %s18, 3
      %p125 = por %p123, %p124
      %p127 = scmp.ne.s32.totalorder %s110, %s126
      %p128 = scmp.eq.s32.totalorder %s18, 0
      %p129 = por %p127, %p128
      %p130 = scmp.le.s32.totalorder 1, %s12
      %p131 = scmp.lt.s32.totalorder %s12, 5
      %p132 = pnand %p130, %p131
      %p133 = pneg %p132
      // Predicated region
      $region9: #{tpu_custom_call.1} parent=5 // pred_check
        _
      $region10: #{tpu_custom_call.1} parent=5 // pred_check_branch
        %135 = sbr.rel (%p132) target = $region12
      $region11: #{tpu_custom_call.1} parent=5 // pred_region
        %s136 = ssub.s32 %s12, 1
        // Predicated region
        $region13: #{tpu_custom_call.1} parent=11 // pred_check
          %p137 = pneg %p45
        $region14: #{tpu_custom_call.1} parent=11 // pred_check_branch
          %139 = sbr.rel (%p137) target = $region16
        $region15: #{tpu_custom_call.1} parent=11 // pred_region
          _
        $region16: #{tpu_custom_call.1} parent=11 // pred_fallthru
          _
        // Predicated region
        $region17: #{tpu_custom_call.1} parent=11 // pred_check
          %p140 = pneg %p66
        $region18: #{tpu_custom_call.1} parent=11 // pred_check_branch
          %142 = sbr.rel (%p140) target = $region20
        $region19: #{tpu_custom_call.1} parent=11 // pred_region
          _
        $region20: #{tpu_custom_call.1} parent=11 // pred_fallthru
          _
      $region12: #{tpu_custom_call.1} parent=5 // pred_fallthru
        _
      %p143 = scmp.lt.s32.totalorder %s12, 4
      // Predicated region
      $region21: #{tpu_custom_call.1} parent=5 // pred_check
        %p144 = pneg %p143
      $region22: #{tpu_custom_call.1} parent=5 // pred_check_branch
        %146 = sbr.rel (%p144) target = $region24
      $region23: #{tpu_custom_call.1} parent=5 // pred_region
        // Predicated region
        $region25: #{tpu_custom_call.1} parent=23 // pred_check
          %p147 = pneg %p88
        $region26: #{tpu_custom_call.1} parent=23 // pred_check_branch
          %149 = sbr.rel (%p147) target = $region28
        $region27: #{tpu_custom_call.1} parent=23 // pred_region
          %p150 = scmp.lt.s32.totalorder %s19, 1
          %s151 = scalar_select %p150, %s19, 1
          %p152 = scmp.lt.s32.totalorder %s20, 1
          %s153 = scalar_select %p152, %s20, 1
          %s154 = smul.addr %s151, 2
          %s155 = sadd.s32 %s153, %s154
          %s156 = smul.addr %s155, 4
          %s157 = scalar_lea.vmem %s2, %s156
        $region28: #{tpu_custom_call.1} parent=23 // pred_fallthru
          _
      $region24: #{tpu_custom_call.1} parent=5 // pred_fallthru
        _
      %p158 = scmp.le.s32.totalorder 1, %s12
      %p159 = scmp.lt.s32.totalorder %s12, 5
      %p160 = pnand %p158, %p159
      %p161 = pneg %p160
      // Predicated region
      $region29: #{tpu_custom_call.1} parent=5 // pred_check
        _
      $region30: #{tpu_custom_call.1} parent=5 // pred_check_branch
        %163 = sbr.rel (%p160) target = $region32
      $region31: #{tpu_custom_call.1} parent=5 // pred_region
        %s164 = ssub.s32 %s12, 1
        %p165 = pneg %p45
        %p166 = pneg %p42
        %p167 = pneg %p66
        %p168 = pneg %p63
        %p169 = scmp.lt.s32.totalorder %s21, 1
        %s170 = scalar_select %p169, %s21, 1
        %p171 = scmp.lt.s32.totalorder %s22, 1
        %s172 = scalar_select %p171, %s22, 1
        %s173 = smul.addr %s170, 2
        %s174 = sadd.s32 %s172, %s173
        %s175 = smul.addr %s174, 4
        %s176 = scalar_lea.vmem %s2, %s175
        %p177 = pneg %p94
        %p178 = pneg %p91
        %p179 = pneg %p122
        %p180 = pneg %p119
        %s181 = sand.u32 %s109, 1
        %s182 = scalar_lea.sflag [#allocation3], %s181
        %s183 = sand.u32 %s109, 1
        %s184 = smul.addr %s183, 8
        %s185 = scalar_lea.vmem [#allocation2], %s184
        %p186 = scmp.lt.s32.totalorder %s21, 1
        %s187 = scalar_select %p186, %s21, 1
        %p188 = scmp.lt.s32.totalorder %s22, 1
        %s189 = scalar_select %p188, %s22, 1
        %s190 = smul.addr %s187, 2
        %s191 = sadd.s32 %s189, %s190
        %s192 = smul.addr %s191, 4
        %s193 = scalar_lea.vmem %s2, %s192
        %v194 = vld [vmem:[%s0] sm:$0xff]
        %v195 = vld [vmem:[%s193] sm:$0xf]
        %v196 = vld [vmem:[%s1] sm:$0xff]
        %198 = vset.pattern.permute.xlu0 0
        %199 = vperm.xlu0 %198, %v196
        %v200 = vpop.permute.xlu0 %199
        %vm202 = vcmask 31744
        %v204 = vsel %vm202, %v194, 0
        %vm206 = vcmask 1043456
        %v208 = vsel %vm206, %v195, 0
        %210 = vmatprep.subr.mxu0 0.0
        %211 = vmatpush1.msra.mxu0 0.0
        %212 = vmatprep.subr.mxu0 0.0
        %213 = vmatpush1.msra.mxu0 0.0
        %214 = vmatprep.subr.mxu0 0.0
        %215 = vmatpush1.msra.mxu0 0.0
        %216 = vmatprep.subr.mxu0 0.0
        %217 = vmatpush1.msra.mxu0 0.0
        %218 = vmatprep.subr.mxu0 0.0
        %219 = vmatpush1.msra.mxu0 0.0
        %220 = vmatprep.subr.mxu0 0.0
        %221 = vmatpush1.msra.mxu0 0.0
        %222 = vmatprep.subr.mxu0 0.0
        %223 = vmatpush1.msra.mxu0 0.0
        %224 = vmatprep.subr.mxu0 0.0
        %225 = vmatpush1.msra.mxu0 0.0
        %226 = vmatprep.subr.mxu0 0.0
        %227 = vmatpush1.msra.mxu0 0.0
        %228 = vmatprep.subr.mxu0 0.0
        %229 = vmatpush1.msra.mxu0 0.0
        %230 = vmatprep.subr.mxu0 0.0
        %231 = vmatpush1.msra.mxu0 0.0
        %232 = vmatprep.subr.mxu0 0.0
        %233 = vmatpush1.msra.mxu0 0.0
        %234 = vmatprep.subr.mxu0 0.0
        %235 = vmatpush1.msra.mxu0 0.0
        %236 = vmatprep.subr.mxu0 0.0
        %237 = vmatpush1.msra.mxu0 0.0
        %238 = vmatprep.subr.mxu0 0.0
        %239 = vmatpush1.msra.mxu0 0.0
        %240 = vmatprep.subr.mxu0 0.0
        %241 = vmatpush1.msra.mxu0 %v208
        %242 = vmatprep.subr.mxu0 0.0
        %243 = vmatpush2.msra.mxu0 0.0
        %244 = vmatprep.subr.mxu0 0.0
        %245 = vmatpush2.msra.mxu0 0.0
        %246 = vmatprep.subr.mxu0 0.0
        %247 = vmatpush2.msra.mxu0 0.0
        %248 = vmatprep.subr.mxu0 0.0
        %249 = vmatpush2.msra.mxu0 0.0
        %250 = vmatprep.subr.mxu0 0.0
        %251 = vmatpush2.msra.mxu0 0.0
        %252 = vmatprep.subr.mxu0 0.0
        %253 = vmatpush2.msra.mxu0 0.0
        %254 = vmatprep.subr.mxu0 0.0
        %255 = vmatpush2.msra.mxu0 0.0
        %256 = vmatprep.subr.mxu0 0.0
        %257 = vmatpush2.msra.mxu0 0.0
        %258 = vmatprep.subr.mxu0 0.0
        %259 = vmatpush2.msra.mxu0 0.0
        %260 = vmatprep.subr.mxu0 0.0
        %261 = vmatpush2.msra.mxu0 0.0
        %262 = vmatprep.subr.mxu0 0.0
        %263 = vmatpush2.msra.mxu0 0.0
        %264 = vmatprep.subr.mxu0 0.0
        %265 = vmatpush2.msra.mxu0 0.0
        %266 = vmatprep.subr.mxu0 0.0
        %267 = vmatpush2.msra.mxu0 0.0
        %268 = vmatprep.subr.mxu0 0.0
        %269 = vmatpush2.msra.mxu0 0.0
        %270 = vmatprep.subr.mxu0 0.0
        %271 = vmatpush2.msra.mxu0 0.0
        %272 = vmatprep.subr.mxu0 0.0
        %273 = vmatpush2.msra.mxu0 0.0
        %274 = vmatprep.mubr.f32.mxu0 0.0
        %275 = vmatmul.mubr.f32.gmra.mxu0 %v204
        %v276 = vpop.f32.mrf.mxu0
        %v277 = vadd.f32 %v200, %v276
        %v278 = vpop.f32.mrf.mxu0
        %279 = vdwg.mxu0
        %v280 = vmax.f32 %v277, 0.0
        %281 = vst [vmem:[%s185] sm:$0xff] %v280
        %s282 = sand.u32 %s109, 1
        %s283 = scalar_lea.sflag [#allocation3], %s282
        %s284 = sand.u32 %s109, 1
        %s285 = smul.addr %s284, 8
        %s286 = scalar_lea.vmem [#allocation2], %s285
        // Predicated region
        $region33: #{tpu_custom_call.1} parent=31 // pred_check
          %p287 = pneg %p119
        $region34: #{tpu_custom_call.1} parent=31 // pred_check_branch
          %289 = sbr.rel (%p287) target = $region36
        $region35: #{tpu_custom_call.1} parent=31 // pred_region
          %s291 = ssub.s32 128, 128
          %292 = vsyncadd %s283, %s291
          %s293 = smul.addr %s21, 2
          %s294 = sadd.s32 %s22, %s293
          %s295 = smul.addr %s294, 128
          %s296 = scalar_lea.hbm %s3, %s295
          %s298 = sshll.u32 %s286, 4
          %s299 = int_to_ptr.vmem [resolvable:$true] %s298
          %301 = dma.vmem_to_hbm [thread:$0]  %s299, 128, %s296, %s283
        $region36: #{tpu_custom_call.1} parent=31 // pred_fallthru
          _
      $region32: #{tpu_custom_call.1} parent=5 // pred_fallthru
        _
      %p302 = scmp.le.s32.totalorder 2, %s12
      // Predicated region
      $region37: #{tpu_custom_call.1} parent=5 // pred_check
        %p303 = pneg %p302
      $region38: #{tpu_custom_call.1} parent=5 // pred_check_branch
        %305 = sbr.rel (%p303) target = $region40
      $region39: #{tpu_custom_call.1} parent=5 // pred_region
        %s306 = ssub.s32 %s12, 2
        // Predicated region
        $region41: #{tpu_custom_call.1} parent=39 // pred_check
          %p307 = pneg %p125
        $region42: #{tpu_custom_call.1} parent=39 // pred_check_branch
          %309 = sbr.rel (%p307) target = $region44
        $region43: #{tpu_custom_call.1} parent=39 // pred_region
          %s310 = sand.u32 %s110, 1
          %s311 = scalar_lea.sflag [#allocation3], %s310
          %s312 = sand.u32 %s110, 1
          %s313 = smul.addr %s312, 8
          %s314 = scalar_lea.vmem [#allocation2], %s313
          %315 = dma.done %s311, 128
        $region44: #{tpu_custom_call.1} parent=39 // pred_fallthru
          _
      $region40: #{tpu_custom_call.1} parent=5 // pred_fallthru
        _
    $region6: #{tpu_custom_call.1} parent=1 // loop_footer
      %s16 = sadd.s32 1, %s12
    $region7: #{tpu_custom_call.1} parent=1 // loop_footer_branch
      %11 = sbr.rel target = $region3
    $region8: #{tpu_custom_call.1} parent=1 // loop_exit
      _
    %316 = vsyncpa [#allocation3], 1
    %s317 = scalar_lea.sflag [#allocation3], 1
    %318 = vsyncpa %s317, 1

</llo_original>
